<compile_context>
chip_gen: v7x
topology: tpu7x:2x2x1
jax: 0.10.0
libtpu: 0.0.40
codegen_flags: <defaults>
</compile_context>

<pallas_src>
import functools

import jax
import jax.numpy as jnp
from jax import lax
from jax.experimental import pallas as pl
from jax.experimental.pallas import tpu as pltpu


def _vmem_capacity_bytes(default=64 * 1024 * 1024):
    """Best-effort per-core VMEM capacity (conservative v7x default)."""
    try:
        info = pltpu.get_tpu_info()
    except Exception:
        return default
    for attr in ("vmem_capacity_bytes", "vmem_size_bytes", "vmem_bytes"):
        val = getattr(info, attr, None)
        if val:
            return int(val)
    return default


# ---------------------------------------------------------------------------
# Path 1: VMEM-resident table, one-hot MXU gather, scale fused (small vocab).
# ---------------------------------------------------------------------------
def _embed_onehot_kernel(ids_ref, emb_ref, out_ref, *, scale):
    ids = ids_ref[...]                                    # (T, 1) int32, VMEM
    tokens = ids.shape[0]
    vocab = emb_ref.shape[0]
    # onehot[t, v] = scale if v == ids[t] else 0  (scale folded -> no extra pass)
    iota = lax.broadcasted_iota(jnp.int32, (tokens, vocab), 1)
    onehot = jnp.where(iota == ids, scale, 0.0).astype(emb_ref.dtype)
    # Single dense (T, E) result written once; MXU is otherwise idle here.
    out_ref[...] = jnp.dot(
        onehot, emb_ref[...],
        preferred_element_type=jnp.float32,
        precision=jax.lax.Precision.HIGHEST,
    ).astype(out_ref.dtype)


def _embed_onehot_call(ids_2d, emb_table, scale, T, n_pad, vmem_limit):
    V, E = emb_table.shape
    kernel = functools.partial(_embed_onehot_kernel, scale=scale)
    return pl.pallas_call(
        kernel,
        out_shape=jax.ShapeDtypeStruct((n_pad, E), emb_table.dtype),
        grid=(n_pad // T,),
        in_specs=[
            pl.BlockSpec((T, 1), lambda i: (i, 0)),     # ids block (VMEM)
            pl.BlockSpec((V, E), lambda i: (0, 0)),     # table, fetched once
        ],
        out_specs=pl.BlockSpec((T, E), lambda i: (i, 0)),
        compiler_params=pltpu.CompilerParams(
            dimension_semantics=("parallel",),          # tokens are independent
            vmem_limit_bytes=int(vmem_limit),
        ),
    )(ids_2d, emb_table)


# ---------------------------------------------------------------------------
# Path 2: table stays in HBM; double-buffered per-row DMA gather across steps.
# ---------------------------------------------------------------------------
def _embed_hbm_kernel(ids_cur_ref, ids_nxt_ref, emb_hbm, out_ref, buf, sems, *,
                      scale, tokens_per_block):
    i = pl.program_id(0)
    n = pl.num_programs(0)
    T = tokens_per_block

    def issue_block(ids_smem, slot):
        # All T row-copies of this block signal the same per-slot semaphore.
        def body(t, carry):
            row = ids_smem[0, t]
            pltpu.make_async_copy(
                emb_hbm.at[pl.ds(row, 1), :],
                buf.at[slot, pl.ds(t, 1), :],
                sems.at[slot],
            ).start()
            return carry
        lax.fori_loop(0, T, body, 0, unroll=8)

    # Prime the pipeline on the very first step.
    @pl.when(i == 0)
    def _():
        issue_block(ids_cur_ref, 0)

    # Prefetch block i+1 into the other slot while block i's DMAs complete.
    @pl.when(i + 1 < n)
    def _():
        issue_block(ids_nxt_ref, (i + 1) % 2)

    slot = i % 2
    # Collapsed wait: one slab-sized wait instead of T scalar waits.
    pltpu.make_async_copy(buf.at[slot], buf.at[slot], sems.at[slot]).wait()

    vals = buf[slot]
    if scale != 1.0:                      # fuse scale into the single writeback
        vals = vals * scale
    out_ref[...] = vals.astype(out_ref.dtype)


def _embed_hbm_call(ids_blocks, emb_table, scale, T, n_blocks, vmem_limit):
    V, E = emb_table.shape
    nb = n_blocks
    kernel = functools.partial(
        _embed_hbm_kernel, scale=scale, tokens_per_block=T)
    return pl.pallas_call(
        kernel,
        out_shape=jax.ShapeDtypeStruct((nb * T, E), emb_table.dtype),
        grid=(nb,),
        in_specs=[
            # Current block ids (SMEM, blocked -> no whole-array SMEM prefetch).
            pl.BlockSpec((1, T), lambda i: (i, 0),
                         memory_space=pltpu.MemorySpace.SMEM),
            # Next block ids (lookahead for the cross-step DMA prefetch).
            pl.BlockSpec((1, T), lambda i: (jnp.minimum(i + 1, nb - 1), 0),
                         memory_space=pltpu.MemorySpace.SMEM),
            # Raw HBM table; rows are gathered with manual DMAs.
            pl.BlockSpec(memory_space=pl.ANY),
        ],
        out_specs=pl.BlockSpec((T, E), lambda i: (i, 0)),
        scratch_shapes=[
            pltpu.VMEM((2, T, E), emb_table.dtype),     # double-buffered slab
            pltpu.SemaphoreType.DMA((2,)),              # one sem per slot
        ],
        compiler_params=pltpu.CompilerParams(
            # Sequential: step i issues DMAs consumed at step i+1.
            dimension_semantics=("arbitrary",),
            vmem_limit_bytes=int(vmem_limit),
        ),
    )(ids_blocks, ids_blocks, emb_table)


# ---------------------------------------------------------------------------
# Public wrapper.
# ---------------------------------------------------------------------------
def embed_forward(ids, emb_table, scale=1.0, tokens_per_block=None,
                  onehot_max_vocab=1024):
    """Embed forward: gather rows of `emb_table` at `ids`, multiply by scale.

    Args:
      ids:       [B, L] integer token ids.
      emb_table: [V, E] embedding matrix.
      scale:     python float, constant multiplier (fused into the gather).
      tokens_per_block: tokens per grid step (None -> auto: 512 if E<=256 else 256).
      onehot_max_vocab: use the VMEM-resident one-hot MXU path when V is at
        most this (and the table fits the VMEM budget); otherwise the
        pipelined HBM row-gather path.

    Returns:
      [B, L, E] embedded tokens (same dtype as `emb_table`).
    """
    B, L = ids.shape
    V, E = emb_table.shape
    n_tok = B * L
    dtype = emb_table.dtype
    itemsize = jnp.dtype(dtype).itemsize

    # Generation-aware VMEM budget (v7x: 64 MiB/TC, v5e/v6e: 128 MiB).
    vmem_cap = _vmem_capacity_bytes()
    vmem_budget = (vmem_cap * 3) // 4

    # Sublane granularity of the output tile: 8 rows (f32), 16 (bf16), 32 (i8).
    sub = max(8, 32 // itemsize)

    # Block size: large blocks amortize the ~0.35us/step overhead; shrink when
    # E is big so the double-buffered slabs fit the (generation-aware) budget.
    if tokens_per_block is None:
        tokens_per_block = 512 if E <= 256 else 256
    T = max(sub, (int(tokens_per_block) // sub) * sub)
    t_cap = max(sub * 4, vmem_budget - (4 << 20)) // max(1, 4 * E * itemsize)
    t_cap = max(sub, (int(t_cap) // sub) * sub)
    T = min(T, t_cap)

    min_pad = pl.cdiv(n_tok, sub) * sub
    if min_pad <= T:
        T = min_pad
        n_pad = min_pad
    else:
        n_pad = pl.cdiv(n_tok, T) * T
    n_blocks = n_pad // T

    # Clip ids (no runtime bounds check on DMA sources / gathers) and pad tail.
    flat_ids = jnp.clip(ids.reshape(n_tok).astype(jnp.int32), 0, V - 1)
    if n_pad > n_tok:
        flat_ids = jnp.pad(flat_ids, (0, n_pad - n_tok))

    # Resident one-hot path accounting (E lane-padded -> unmasked stores).
    E_pad = E if E % 128 == 0 else pl.cdiv(E, 128) * 128
    table_bytes = V * E_pad * itemsize
    out_block_bytes = T * E_pad * itemsize
    ids_block_bytes = T * 128 * 4            # (T, 1) int32, lane-padded
    onehot_bytes = T * V * 4                 # f32 intermediate before cast
    resident_need = (2 * table_bytes + 2 * out_block_bytes
                     + 2 * ids_block_bytes + onehot_bytes + (4 << 20))

    use_resident = (V <= onehot_max_vocab) and (resident_need <= vmem_budget)

    if use_resident:
        emb_in = emb_table
        if E_pad != E:
            emb_in = jnp.pad(emb_table, ((0, 0), (0, E_pad - E)))
        vmem_limit = min(vmem_cap, max(resident_need, 32 << 20))
        out_flat = _embed_onehot_call(
            flat_ids[:, None], emb_in, float(scale), T, n_pad, vmem_limit)
    else:
        hbm_need = 4 * T * E * itemsize + (4 << 20)
        vmem_limit = min(vmem_cap, max(hbm_need, 32 << 20))
        out_flat = _embed_hbm_call(
            flat_ids.reshape(n_blocks, T), emb_table, float(scale), T,
            n_blocks, vmem_limit)

    return out_flat[:n_tok, :E].reshape(B, L, E)


if __name__ == "__main__":
    # Small shapes consistent with the module: vocab V=32, embed dim E=128,
    # batch B=2, sequence L=8.
    V, E = 32, 128
    B, L = 2, 8
    SCALE = 2.0

    key = jax.random.PRNGKey(0)
    k_emb, k_ids = jax.random.split(key)

    emb_table = jax.random.normal(k_emb, (V, E), dtype=jnp.float32)
    ids = jax.random.randint(k_ids, (B, L), 0, V, dtype=jnp.int32)
    ref = jnp.take(emb_table, ids, axis=0) * SCALE

    # Fast path: VMEM-resident table, one-hot MXU gather, fused scale.
    out = jax.block_until_ready(embed_forward(ids, emb_table, scale=SCALE))
    assert out.shape == (B, L, E), out.shape
    assert jnp.allclose(out, ref, atol=1e-4, rtol=1e-4), "resident path mismatch"

    # Forced fallback path: pipelined HBM row-gather (single block).
    out2 = jax.block_until_ready(
        embed_forward(ids, emb_table, scale=SCALE, onehot_max_vocab=0))
    assert jnp.allclose(out2, ref, atol=1e-4, rtol=1e-4), "HBM path mismatch"

    # Multi-block checks (grid > 1): exercises the resident path with several
    # grid steps and the HBM path's cross-step double-buffered prefetch.
    B2, L2 = 4, 160
    ids2 = jax.random.randint(jax.random.PRNGKey(1), (B2, L2), 0, V, jnp.int32)
    ref2 = jnp.take(emb_table, ids2, axis=0) * SCALE
    out3 = jax.block_until_ready(
        embed_forward(ids2, emb_table, scale=SCALE, tokens_per_block=64))
    assert jnp.allclose(out3, ref2, atol=1e-4, rtol=1e-4), \
        "resident multi-block mismatch"
    out4 = jax.block_until_ready(
        embed_forward(ids2, emb_table, scale=SCALE, tokens_per_block=64,
                      onehot_max_vocab=0))
    assert jnp.allclose(out4, ref2, atol=1e-4, rtol=1e-4), \
        "HBM multi-block mismatch"

    print("KERNEL_OK")
</pallas_src>

<mosaic_0001>
module attributes {stable_mosaic.version = 11 : i64} {
  func.func @_embed_onehot_kernel(%arg0: i32, %arg1: memref<16x1xi32, #tpu.memory_space<vmem>>, %arg2: memref<32x128xf32, #tpu.memory_space<vmem>>, %arg3: memref<16x128xf32, #tpu.memory_space<vmem>>) attributes {dimension_semantics = [#tpu.dimension_semantics<parallel>], iteration_bounds = array<i64: 1>, scalar_prefetch = 0 : i64, scratch_operands = 0 : i64, tpu.core_type = #tpu.core_type<tc>, window_params = [{transform_indices = @transform_0, window_bounds = array<i64: 16, 1>}, {pipeline_mode = #tpu.pipeline_mode<synchronous>, transform_indices = @transform_1, window_bounds = array<i64: 32, 128>}, {transform_indices = @transform_2, window_bounds = array<i64: 16, 128>}]} {
    %c0 = arith.constant 0 : index
    %c0_0 = arith.constant 0 : index
    %0 = vector.load %arg1[%c0, %c0_0] : memref<16x1xi32, #tpu.memory_space<vmem>>, vector<16x1xi32>
    %1 = tpu.iota {dimensions = array<i32: 1>} : vector<16x32xi32>
    %2 = vector.broadcast %0 : vector<16x1xi32> to vector<16x32xi32>
    %3 = arith.cmpi eq, %1, %2 : vector<16x32xi32>
    %cst = arith.constant 2.000000e+00 : f32
    %cst_1 = arith.constant 0.000000e+00 : f32
    %4 = vector.broadcast %cst : f32 to vector<16x32xf32>
    %5 = vector.broadcast %cst_1 : f32 to vector<16x32xf32>
    %6 = arith.select %3, %4, %5 : vector<16x32xi1>, vector<16x32xf32>
    %c0_2 = arith.constant 0 : index
    %c0_3 = arith.constant 0 : index
    %7 = vector.load %arg2[%c0_2, %c0_3] : memref<32x128xf32, #tpu.memory_space<vmem>>, vector<32x128xf32>
    %cst_4 = arith.constant dense<0.000000e+00> : vector<16x128xf32>
    %8 = tpu.matmul %6, %7, %cst_4 {dimension_numbers = #tpu.dot_dimension_numbers<[1], [0], [0], [1], [0, 0, 1, 1], [], []>, precision = #tpu.contract_precision<fp32>} : vector<16x32xf32>, vector<32x128xf32>, vector<16x128xf32> -> vector<16x128xf32>
    %c0_5 = arith.constant 0 : index
    %c0_6 = arith.constant 0 : index
    %9 = vector.load %arg3[%c0_5, %c0_6] : memref<16x128xf32, #tpu.memory_space<vmem>>, vector<16x128xf32>
    tpu.vector_store %arg3[%c0_5, %c0_6], %8 {strides = array<i32>} : memref<16x128xf32, #tpu.memory_space<vmem>>, vector<16x128xf32>,
    return
  }
  func.func @transform_0(%arg0: i32) -> (i32, i32) {
    %c0_i32 = arith.constant 0 : i32
    %c0_i32_0 = arith.constant 0 : i32
    return %arg0, %c0_i32 : i32, i32
  }
  func.func @transform_1(%arg0: i32) -> (i32, i32) {
    %c0_i32 = arith.constant 0 : i32
    %c0_i32_0 = arith.constant 0 : i32
    %c0_i32_1 = arith.constant 0 : i32
    return %c0_i32, %c0_i32_0 : i32, i32
  }
  func.func @transform_2(%arg0: i32) -> (i32, i32) {
    %c0_i32 = arith.constant 0 : i32
    %c0_i32_0 = arith.constant 0 : i32
    return %arg0, %c0_i32 : i32, i32
  }
}

</mosaic_0001>

<llo_original>
// kernel: tpu_custom_call.1
$region0: #{tpu_custom_call.1}
  #allocation0 [shape = 'u32[]', space=smem, size = 0x4, offset = 0x4, fixed_abs, tag = 'smem constant byte address 0x4 - core index']
  #allocation1 [shape = 'u32[144,128]{1,0:T(1,128)}', space=vmem, size = 0x12000, scoped, tag = 'internal scratch']
  %s0 = inlined_call_operand.vmem [shape: s32[16,1], index: 0, kind: input, shape index: {}]
  %s1 = inlined_call_operand.hbm [shape: f32[32,128], index: 1, kind: input, shape index: {}]
  %s2 = inlined_call_operand.hbm [shape: f32[16,128], index: 2, kind: output, shape index: {}]
  %s3 = sld [smem:[#allocation0]]
  $region22: #{tpu_custom_call.1} parent=0
    _
  %s5 = ssub.s32 1, %s3
  %s6 = scalar_select 0, %s5, %s3
  $region1: #{tpu_custom_call.1} parent=0
    #allocation2 [shape = 'u8[16384]{0}', space=vmem, size = 0x4000, scoped, tag = 'input window, operand 1, single buffered']
    #allocation3 [shape = 's32[1]{0}', space=sflag, size = 0x4, scoped, tag = 'scoped memory for tpu_custom_call.1']
    #allocation4 [shape = 's32[1]{0}', space=sflag, size = 0x4, scoped, tag = 'scoped memory for tpu_custom_call.1']
    #allocation5 [shape = 'u8[8192]{0}', space=vmem, size = 0x2000, scoped, tag = 'output window, operand 0, single buffered']
    %7 = vsyncpa [#allocation3], 0
    %8 = vsyncpa [#allocation4], 0
    // Predicated region
    $region2: #{tpu_custom_call.1} parent=1 // pred_check
      _
    $region3: #{tpu_custom_call.1} parent=1 // pred_check_branch
      %10 = sbr.rel (0) target = $region5
    $region4: #{tpu_custom_call.1} parent=1 // pred_region
      _
    $region5: #{tpu_custom_call.1} parent=1 // pred_fallthru
      _
    // Predicated region
    $region6: #{tpu_custom_call.1} parent=1 // pred_check
      _
    $region7: #{tpu_custom_call.1} parent=1 // pred_check_branch
      %12 = sbr.rel (0) target = $region9
    $region8: #{tpu_custom_call.1} parent=1 // pred_region
      %s14 = ssub.s32 512, 512
      %15 = vsyncadd [#allocation3], %s14
      %s16 = sshll.u32 [#allocation2], 4
      %s17 = int_to_ptr.vmem [resolvable:$true] %s16
      %22 = dma.hbm_to_vmem [thread:$0]  %s1, 512, %s17, [#allocation3], 128, 128, 8
    $region9: #{tpu_custom_call.1} parent=1 // pred_fallthru
      _
    // Predicated region
    $region10: #{tpu_custom_call.1} parent=1 // pred_check
      _
    $region11: #{tpu_custom_call.1} parent=1 // pred_check_branch
      %24 = sbr.rel (0) target = $region13
    $region12: #{tpu_custom_call.1} parent=1 // pred_region
      %25 = dma.done [#allocation3], 512
    $region13: #{tpu_custom_call.1} parent=1 // pred_fallthru
      _
    %v26 = vld [vmem:[%s0] sm:$0xff]
    %v27 = vld [vmem:[%s0 + $0x8] sm:$0xff]
    %v28 = vlaneseq
    %v29 = vand.u32 %v28, 127
    %30 = vset.pattern.permute.xlu0 0
    %31 = vperm.xlu0 %30, %v26
    %v32 = vpop.permute.xlu0 %31
    %33 = vset.pattern.permute.xlu0 0
    %34 = vperm.xlu0 %33, %v27
    %v35 = vpop.permute.xlu0 %34
    %vm36 = vcmp.eq.s32.totalorder %v29, %v32
    %vm37 = vcmp.eq.s32.totalorder %v29, %v35
    %v38 = vsel %vm36, 2.0, 0.0
    %v39 = vsel %vm37, 2.0, 0.0
    %v40 = vld [vmem:[#allocation2] sm:$0xff]
    %v41 = vld [vmem:[#allocation2 + $0x8] sm:$0xff]
    %v42 = vld [vmem:[#allocation2 + $0x10] sm:$0xff]
    %v43 = vld [vmem:[#allocation2 + $0x18] sm:$0xff]
    %vm44 = vcmask 261120
    %v46 = vsel %vm44, %v38, 0
    %v49 = vsel %vm44, %v39, 0
    %51 = vmatprep.subr.mxu0 0.0
    %v52 = vand.u32 %v40, 4294901760
    %53 = vmatpush1.msra.mxu0 %v52
    %54 = vmatprep.subr.mxu0 0.0
    %v55 = vand.u32 %v41, 4294901760
    %56 = vmatpush1.msra.mxu0 %v55
    %57 = vmatprep.subr.mxu0 0.0
    %v58 = vand.u32 %v42, 4294901760
    %59 = vmatpush1.msra.mxu0 %v58
    %60 = vmatprep.subr.mxu0 0.0
    %v61 = vand.u32 %v43, 4294901760
    %62 = vmatpush1.msra.mxu0 %v61
    %63 = vmatprep.subr.mxu0 0.0
    %64 = vmatpush1.msra.mxu0 0.0
    %65 = vmatprep.subr.mxu0 0.0
    %66 = vmatpush1.msra.mxu0 0.0
    %67 = vmatprep.subr.mxu0 0.0
    %68 = vmatpush1.msra.mxu0 0.0
    %69 = vmatprep.subr.mxu0 0.0
    %70 = vmatpush1.msra.mxu0 0.0
    %71 = vmatprep.subr.mxu0 0.0
    %72 = vmatpush1.msra.mxu0 0.0
    %73 = vmatprep.subr.mxu0 0.0
    %74 = vmatpush1.msra.mxu0 0.0
    %75 = vmatprep.subr.mxu0 0.0
    %76 = vmatpush1.msra.mxu0 0.0
    %77 = vmatprep.subr.mxu0 0.0
    %78 = vmatpush1.msra.mxu0 0.0
    %79 = vmatprep.subr.mxu0 0.0
    %80 = vmatpush1.msra.mxu0 0.0
    %81 = vmatprep.subr.mxu0 0.0
    %82 = vmatpush1.msra.mxu0 0.0
    %83 = vmatprep.subr.mxu0 0.0
    %84 = vmatpush1.msra.mxu0 0.0
    %85 = vmatprep.subr.mxu0 0.0
    %86 = vmatpush1.msra.mxu0 0.0
    %87 = vmatprep.subr.mxu0 0.0
    %88 = vmatpush1.msra.mxu0 0.0
    %89 = vmatprep.subr.mxu0 0.0
    %90 = vmatpush1.msra.mxu0 0.0
    %91 = vmatprep.subr.mxu0 0.0
    %92 = vmatpush1.msra.mxu0 0.0
    %93 = vmatprep.subr.mxu0 0.0
    %94 = vmatpush1.msra.mxu0 0.0
    %95 = vmatprep.subr.mxu0 0.0
    %96 = vmatpush1.msra.mxu0 0.0
    %97 = vmatprep.subr.mxu0 0.0
    %98 = vmatpush1.msra.mxu0 0.0
    %99 = vmatprep.subr.mxu0 0.0
    %100 = vmatpush1.msra.mxu0 0.0
    %101 = vmatprep.subr.mxu0 0.0
    %102 = vmatpush1.msra.mxu0 0.0
    %103 = vmatprep.subr.mxu0 0.0
    %104 = vmatpush1.msra.mxu0 0.0
    %105 = vmatprep.subr.mxu0 0.0
    %106 = vmatpush1.msra.mxu0 0.0
    %107 = vmatprep.subr.mxu0 0.0
    %108 = vmatpush1.msra.mxu0 0.0
    %109 = vmatprep.subr.mxu0 0.0
    %110 = vmatpush1.msra.mxu0 0.0
    %111 = vmatprep.subr.mxu0 0.0
    %112 = vmatpush1.msra.mxu0 0.0
    %113 = vmatprep.subr.mxu0 0.0
    %114 = vmatpush1.msra.mxu0 0.0
    %115 = vmatprep.subr.mxu0 0.0
    %116 = vmatpush1.msra.mxu0 0.0
    %117 = vmatprep.subr.mxu0 0.0
    %118 = vmatpush1.msra.mxu0 0.0
    %119 = vmatprep.mubr.f32.mxu0 0.0
    %v120 = vand.u32 %v46, 4294901760
    %v121 = vsub.f32 %v46, %v120
    %v122 = vand.u32 %v121, 4294901760
    %v123 = vsub.f32 %v121, %v122
    %v124 = vand.u32 %v123, 4294901760
    %125 = vmatmul.mubr.f32.gmra.mrb[0].mxu0 %v124
    %v126 = vpop.f32.mrb[0].mxu0
    %v127 = vadd.f32 0.0, %v126
    %v128 = vpop.f32.mrb[0].mxu0
    %129 = vmatprep.mubr.f32.mxu0 0.0
    %v130 = vand.u32 %v49, 4294901760
    %v131 = vsub.f32 %v49, %v130
    %v132 = vand.u32 %v131, 4294901760
    %v133 = vsub.f32 %v131, %v132
    %v134 = vand.u32 %v133, 4294901760
    %135 = vmatmul.mubr.f32.gmra.mrb[0].mxu0 %v134
    %v136 = vpop.f32.mrb[0].mxu0
    %v137 = vadd.f32 0.0, %v136
    %v138 = vpop.f32.mrb[0].mxu0
    %139 = vdwg.mxu0
    %140 = vmatprep.subr.mxu0 0.0
    %v141 = vand.u32 %v40, 4294901760
    %v142 = vsub.f32 %v40, %v141
    %v143 = vand.u32 %v142, 4294901760
    %v144 = vsub.f32 %v142, %v143
    %v145 = vand.u32 %v144, 4294901760
    %146 = vmatpush1.msra.mxu0 %v145
    %147 = vmatprep.subr.mxu0 0.0
    %v148 = vand.u32 %v41, 4294901760
    %v149 = vsub.f32 %v41, %v148
    %v150 = vand.u32 %v149, 4294901760
    %v151 = vsub.f32 %v149, %v150
    %v152 = vand.u32 %v151, 4294901760
    %153 = vmatpush1.msra.mxu0 %v152
    %154 = vmatprep.subr.mxu0 0.0
    %v155 = vand.u32 %v42, 4294901760
    %v156 = vsub.f32 %v42, %v155
    %v157 = vand.u32 %v156, 4294901760
    %v158 = vsub.f32 %v156, %v157
    %v159 = vand.u32 %v158, 4294901760
    %160 = vmatpush1.msra.mxu0 %v159
    %161 = vmatprep.subr.mxu0 0.0
    %v162 = vand.u32 %v43, 4294901760
    %v163 = vsub.f32 %v43, %v162
    %v164 = vand.u32 %v163, 4294901760
    %v165 = vsub.f32 %v163, %v164
    %v166 = vand.u32 %v165, 4294901760
    %167 = vmatpush1.msra.mxu0 %v166
    %168 = vmatprep.subr.mxu0 0.0
    %169 = vmatpush1.msra.mxu0 0.0
    %170 = vmatprep.subr.mxu0 0.0
    %171 = vmatpush1.msra.mxu0 0.0
    %172 = vmatprep.subr.mxu0 0.0
    %173 = vmatpush1.msra.mxu0 0.0
    %174 = vmatprep.subr.mxu0 0.0
    %175 = vmatpush1.msra.mxu0 0.0
    %176 = vmatprep.subr.mxu0 0.0
    %177 = vmatpush1.msra.mxu0 0.0
    %178 = vmatprep.subr.mxu0 0.0
    %179 = vmatpush1.msra.mxu0 0.0
    %180 = vmatprep.subr.mxu0 0.0
    %181 = vmatpush1.msra.mxu0 0.0
    %182 = vmatprep.subr.mxu0 0.0
    %183 = vmatpush1.msra.mxu0 0.0
    %184 = vmatprep.subr.mxu0 0.0
    %185 = vmatpush1.msra.mxu0 0.0
    %186 = vmatprep.subr.mxu0 0.0
    %187 = vmatpush1.msra.mxu0 0.0
    %188 = vmatprep.subr.mxu0 0.0
    %189 = vmatpush1.msra.mxu0 0.0
    %190 = vmatprep.subr.mxu0 0.0
    %191 = vmatpush1.msra.mxu0 0.0
    %192 = vmatprep.subr.mxu0 0.0
    %193 = vmatpush1.msra.mxu0 0.0
    %194 = vmatprep.subr.mxu0 0.0
    %195 = vmatpush1.msra.mxu0 0.0
    %196 = vmatprep.subr.mxu0 0.0
    %197 = vmatpush1.msra.mxu0 0.0
    %198 = vmatprep.subr.mxu0 0.0
    %199 = vmatpush1.msra.mxu0 0.0
    %200 = vmatprep.subr.mxu0 0.0
    %201 = vmatpush1.msra.mxu0 0.0
    %202 = vmatprep.subr.mxu0 0.0
    %203 = vmatpush1.msra.mxu0 0.0
    %204 = vmatprep.subr.mxu0 0.0
    %205 = vmatpush1.msra.mxu0 0.0
    %206 = vmatprep.subr.mxu0 0.0
    %207 = vmatpush1.msra.mxu0 0.0
    %208 = vmatprep.subr.mxu0 0.0
    %209 = vmatpush1.msra.mxu0 0.0
    %210 = vmatprep.subr.mxu0 0.0
    %211 = vmatpush1.msra.mxu0 0.0
    %212 = vmatprep.subr.mxu0 0.0
    %213 = vmatpush1.msra.mxu0 0.0
    %214 = vmatprep.subr.mxu0 0.0
    %215 = vmatpush1.msra.mxu0 0.0
    %216 = vmatprep.subr.mxu0 0.0
    %217 = vmatpush1.msra.mxu0 0.0
    %218 = vmatprep.subr.mxu0 0.0
    %219 = vmatpush1.msra.mxu0 0.0
    %220 = vmatprep.subr.mxu0 0.0
    %221 = vmatpush1.msra.mxu0 0.0
    %222 = vmatprep.subr.mxu0 0.0
    %223 = vmatpush1.msra.mxu0 0.0
    %224 = vmatprep.mubr.f32.mxu0 0.0
    %v225 = vand.u32 %v46, 4294901760
    %226 = vmatmul.mubr.f32.gmra.mrb[0].mxu0 %v225
    %v227 = vpop.f32.mrb[0].mxu0
    %v228 = vadd.f32 %v127, %v227
    %v229 = vpop.f32.mrb[0].mxu0
    %230 = vmatprep.mubr.f32.mxu0 0.0
    %v231 = vand.u32 %v49, 4294901760
    %232 = vmatmul.mubr.f32.gmra.mrb[0].mxu0 %v231
    %v233 = vpop.f32.mrb[0].mxu0
    %v234 = vadd.f32 %v137, %v233
    %v235 = vpop.f32.mrb[0].mxu0
    %236 = vdwg.mxu0
    %237 = vmatprep.subr.mxu0 0.0
    %v238 = vand.u32 %v40, 4294901760
    %v239 = vsub.f32 %v40, %v238
    %240 = vmatpush1.msra.mxu0 %v239
    %241 = vmatprep.subr.mxu0 0.0
    %v242 = vand.u32 %v41, 4294901760
    %v243 = vsub.f32 %v41, %v242
    %244 = vmatpush1.msra.mxu0 %v243
    %245 = vmatprep.subr.mxu0 0.0
    %v246 = vand.u32 %v42, 4294901760
    %v247 = vsub.f32 %v42, %v246
    %248 = vmatpush1.msra.mxu0 %v247
    %249 = vmatprep.subr.mxu0 0.0
    %v250 = vand.u32 %v43, 4294901760
    %v251 = vsub.f32 %v43, %v250
    %252 = vmatpush1.msra.mxu0 %v251
    %253 = vmatprep.subr.mxu0 0.0
    %254 = vmatpush1.msra.mxu0 0.0
    %255 = vmatprep.subr.mxu0 0.0
    %256 = vmatpush1.msra.mxu0 0.0
    %257 = vmatprep.subr.mxu0 0.0
    %258 = vmatpush1.msra.mxu0 0.0
    %259 = vmatprep.subr.mxu0 0.0
    %260 = vmatpush1.msra.mxu0 0.0
    %261 = vmatprep.subr.mxu0 0.0
    %262 = vmatpush1.msra.mxu0 0.0
    %263 = vmatprep.subr.mxu0 0.0
    %264 = vmatpush1.msra.mxu0 0.0
    %265 = vmatprep.subr.mxu0 0.0
    %266 = vmatpush1.msra.mxu0 0.0
    %267 = vmatprep.subr.mxu0 0.0
    %268 = vmatpush1.msra.mxu0 0.0
    %269 = vmatprep.subr.mxu0 0.0
    %270 = vmatpush1.msra.mxu0 0.0
    %271 = vmatprep.subr.mxu0 0.0
    %272 = vmatpush1.msra.mxu0 0.0
    %273 = vmatprep.subr.mxu0 0.0
    %274 = vmatpush1.msra.mxu0 0.0
    %275 = vmatprep.subr.mxu0 0.0
    %276 = vmatpush1.msra.mxu0 0.0
    %277 = vmatprep.subr.mxu0 0.0
    %278 = vmatpush1.msra.mxu0 0.0
    %279 = vmatprep.subr.mxu0 0.0
    %280 = vmatpush1.msra.mxu0 0.0
    %281 = vmatprep.subr.mxu0 0.0
    %282 = vmatpush1.msra.mxu0 0.0
    %283 = vmatprep.subr.mxu0 0.0
    %284 = vmatpush1.msra.mxu0 0.0
    %285 = vmatprep.subr.mxu0 0.0
    %286 = vmatpush1.msra.mxu0 0.0
    %287 = vmatprep.subr.mxu0 0.0
    %288 = vmatpush1.msra.mxu0 0.0
    %289 = vmatprep.subr.mxu0 0.0
    %290 = vmatpush1.msra.mxu0 0.0
    %291 = vmatprep.subr.mxu0 0.0
    %292 = vmatpush1.msra.mxu0 0.0
    %293 = vmatprep.subr.mxu0 0.0
    %294 = vmatpush1.msra.mxu0 0.0
    %295 = vmatprep.subr.mxu0 0.0
    %296 = vmatpush1.msra.mxu0 0.0
    %297 = vmatprep.subr.mxu0 0.0
    %298 = vmatpush1.msra.mxu0 0.0
    %299 = vmatprep.subr.mxu0 0.0
    %300 = vmatpush1.msra.mxu0 0.0
    %301 = vmatprep.subr.mxu0 0.0
    %302 = vmatpush1.msra.mxu0 0.0
    %303 = vmatprep.subr.mxu0 0.0
    %304 = vmatpush1.msra.mxu0 0.0
    %305 = vmatprep.subr.mxu0 0.0
    %306 = vmatpush1.msra.mxu0 0.0
    %307 = vmatprep.subr.mxu0 0.0
    %308 = vmatpush1.msra.mxu0 0.0
    %309 = vmatprep.mubr.f32.mxu0 0.0
    %v310 = vand.u32 %v46, 4294901760
    %v311 = vsub.f32 %v46, %v310
    %312 = vmatmul.mubr.f32.gmra.mrb[0].mxu0 %v311
    %v313 = vpop.f32.mrb[0].mxu0
    %v314 = vadd.f32 %v228, %v313
    %v315 = vpop.f32.mrb[0].mxu0
    %316 = vmatprep.mubr.f32.mxu0 0.0
    %v317 = vand.u32 %v49, 4294901760
    %v318 = vsub.f32 %v49, %v317
    %319 = vmatmul.mubr.f32.gmra.mrb[0].mxu0 %v318
    %v320 = vpop.f32.mrb[0].mxu0
    %v321 = vadd.f32 %v234, %v320
    %v322 = vpop.f32.mrb[0].mxu0
    %323 = vdwg.mxu0
    %324 = vmatprep.subr.mxu0 0.0
    %v325 = vand.u32 %v40, 4294901760
    %326 = vmatpush1.msra.mxu0 %v325
    %327 = vmatprep.subr.mxu0 0.0
    %v328 = vand.u32 %v41, 4294901760
    %329 = vmatpush1.msra.mxu0 %v328
    %330 = vmatprep.subr.mxu0 0.0
    %v331 = vand.u32 %v42, 4294901760
    %332 = vmatpush1.msra.mxu0 %v331
    %333 = vmatprep.subr.mxu0 0.0
    %v334 = vand.u32 %v43, 4294901760
    %335 = vmatpush1.msra.mxu0 %v334
    %336 = vmatprep.subr.mxu0 0.0
    %337 = vmatpush1.msra.mxu0 0.0
    %338 = vmatprep.subr.mxu0 0.0
    %339 = vmatpush1.msra.mxu0 0.0
    %340 = vmatprep.subr.mxu0 0.0
    %341 = vmatpush1.msra.mxu0 0.0
    %342 = vmatprep.subr.mxu0 0.0
    %343 = vmatpush1.msra.mxu0 0.0
    %344 = vmatprep.subr.mxu0 0.0
    %345 = vmatpush1.msra.mxu0 0.0
    %346 = vmatprep.subr.mxu0 0.0
    %347 = vmatpush1.msra.mxu0 0.0
    %348 = vmatprep.subr.mxu0 0.0
    %349 = vmatpush1.msra.mxu0 0.0
    %350 = vmatprep.subr.mxu0 0.0
    %351 = vmatpush1.msra.mxu0 0.0
    %352 = vmatprep.subr.mxu0 0.0
    %353 = vmatpush1.msra.mxu0 0.0
    %354 = vmatprep.subr.mxu0 0.0
    %355 = vmatpush1.msra.mxu0 0.0
    %356 = vmatprep.subr.mxu0 0.0
    %357 = vmatpush1.msra.mxu0 0.0
    %358 = vmatprep.subr.mxu0 0.0
    %359 = vmatpush1.msra.mxu0 0.0
    %360 = vmatprep.subr.mxu0 0.0
    %361 = vmatpush1.msra.mxu0 0.0
    %362 = vmatprep.subr.mxu0 0.0
    %363 = vmatpush1.msra.mxu0 0.0
    %364 = vmatprep.subr.mxu0 0.0
    %365 = vmatpush1.msra.mxu0 0.0
    %366 = vmatprep.subr.mxu0 0.0
    %367 = vmatpush1.msra.mxu0 0.0
    %368 = vmatprep.subr.mxu0 0.0
    %369 = vmatpush1.msra.mxu0 0.0
    %370 = vmatprep.subr.mxu0 0.0
    %371 = vmatpush1.msra.mxu0 0.0
    %372 = vmatprep.subr.mxu0 0.0
    %373 = vmatpush1.msra.mxu0 0.0
    %374 = vmatprep.subr.mxu0 0.0
    %375 = vmatpush1.msra.mxu0 0.0
    %376 = vmatprep.subr.mxu0 0.0
    %377 = vmatpush1.msra.mxu0 0.0
    %378 = vmatprep.subr.mxu0 0.0
    %379 = vmatpush1.msra.mxu0 0.0
    %380 = vmatprep.subr.mxu0 0.0
    %381 = vmatpush1.msra.mxu0 0.0
    %382 = vmatprep.subr.mxu0 0.0
    %383 = vmatpush1.msra.mxu0 0.0
    %384 = vmatprep.subr.mxu0 0.0
    %385 = vmatpush1.msra.mxu0 0.0
    %386 = vmatprep.subr.mxu0 0.0
    %387 = vmatpush1.msra.mxu0 0.0
    %388 = vmatprep.subr.mxu0 0.0
    %389 = vmatpush1.msra.mxu0 0.0
    %390 = vmatprep.subr.mxu0 0.0
    %391 = vmatpush1.msra.mxu0 0.0
    %392 = vmatprep.mubr.f32.mxu0 0.0
    %v393 = vand.u32 %v46, 4294901760
    %v394 = vsub.f32 %v46, %v393
    %v395 = vand.u32 %v394, 4294901760
    %396 = vmatmul.mubr.f32.gmra.mrb[0].mxu0 %v395
    %v397 = vpop.f32.mrb[0].mxu0
    %v398 = vadd.f32 %v314, %v397
    %v399 = vpop.f32.mrb[0].mxu0
    %400 = vmatprep.mubr.f32.mxu0 0.0
    %v401 = vand.u32 %v49, 4294901760
    %v402 = vsub.f32 %v49, %v401
    %v403 = vand.u32 %v402, 4294901760
    %404 = vmatmul.mubr.f32.gmra.mrb[0].mxu0 %v403
    %v405 = vpop.f32.mrb[0].mxu0
    %v406 = vadd.f32 %v321, %v405
    %v407 = vpop.f32.mrb[0].mxu0
    %408 = vdwg.mxu0
    %409 = vmatprep.subr.mxu0 0.0
    %v410 = vand.u32 %v40, 4294901760
    %v411 = vsub.f32 %v40, %v410
    %v412 = vand.u32 %v411, 4294901760
    %413 = vmatpush1.msra.mxu0 %v412
    %414 = vmatprep.subr.mxu0 0.0
    %v415 = vand.u32 %v41, 4294901760
    %v416 = vsub.f32 %v41, %v415
    %v417 = vand.u32 %v416, 4294901760
    %418 = vmatpush1.msra.mxu0 %v417
    %419 = vmatprep.subr.mxu0 0.0
    %v420 = vand.u32 %v42, 4294901760
    %v421 = vsub.f32 %v42, %v420
    %v422 = vand.u32 %v421, 4294901760
    %423 = vmatpush1.msra.mxu0 %v422
    %424 = vmatprep.subr.mxu0 0.0
    %v425 = vand.u32 %v43, 4294901760
    %v426 = vsub.f32 %v43, %v425
    %v427 = vand.u32 %v426, 4294901760
    %428 = vmatpush1.msra.mxu0 %v427
    %429 = vmatprep.subr.mxu0 0.0
    %430 = vmatpush1.msra.mxu0 0.0
    %431 = vmatprep.subr.mxu0 0.0
    %432 = vmatpush1.msra.mxu0 0.0
    %433 = vmatprep.subr.mxu0 0.0
    %434 = vmatpush1.msra.mxu0 0.0
    %435 = vmatprep.subr.mxu0 0.0
    %436 = vmatpush1.msra.mxu0 0.0
    %437 = vmatprep.subr.mxu0 0.0
    %438 = vmatpush1.msra.mxu0 0.0
    %439 = vmatprep.subr.mxu0 0.0
    %440 = vmatpush1.msra.mxu0 0.0
    %441 = vmatprep.subr.mxu0 0.0
    %442 = vmatpush1.msra.mxu0 0.0
    %443 = vmatprep.subr.mxu0 0.0
    %444 = vmatpush1.msra.mxu0 0.0
    %445 = vmatprep.subr.mxu0 0.0
    %446 = vmatpush1.msra.mxu0 0.0
    %447 = vmatprep.subr.mxu0 0.0
    %448 = vmatpush1.msra.mxu0 0.0
    %449 = vmatprep.subr.mxu0 0.0
    %450 = vmatpush1.msra.mxu0 0.0
    %451 = vmatprep.subr.mxu0 0.0
    %452 = vmatpush1.msra.mxu0 0.0
    %453 = vmatprep.subr.mxu0 0.0
    %454 = vmatpush1.msra.mxu0 0.0
    %455 = vmatprep.subr.mxu0 0.0
    %456 = vmatpush1.msra.mxu0 0.0
    %457 = vmatprep.subr.mxu0 0.0
    %458 = vmatpush1.msra.mxu0 0.0
    %459 = vmatprep.subr.mxu0 0.0
    %460 = vmatpush1.msra.mxu0 0.0
    %461 = vmatprep.subr.mxu0 0.0
    %462 = vmatpush1.msra.mxu0 0.0
    %463 = vmatprep.subr.mxu0 0.0
    %464 = vmatpush1.msra.mxu0 0.0
    %465 = vmatprep.subr.mxu0 0.0
    %466 = vmatpush1.msra.mxu0 0.0
    %467 = vmatprep.subr.mxu0 0.0
    %468 = vmatpush1.msra.mxu0 0.0
    %469 = vmatprep.subr.mxu0 0.0
    %470 = vmatpush1.msra.mxu0 0.0
    %471 = vmatprep.subr.mxu0 0.0
    %472 = vmatpush1.msra.mxu0 0.0
    %473 = vmatprep.subr.mxu0 0.0
    %474 = vmatpush1.msra.mxu0 0.0
    %475 = vmatprep.subr.mxu0 0.0
    %476 = vmatpush1.msra.mxu0 0.0
    %477 = vmatprep.subr.mxu0 0.0
    %478 = vmatpush1.msra.mxu0 0.0
    %479 = vmatprep.subr.mxu0 0.0
    %480 = vmatpush1.msra.mxu0 0.0
    %481 = vmatprep.subr.mxu0 0.0
    %482 = vmatpush1.msra.mxu0 0.0
    %483 = vmatprep.subr.mxu0 0.0
    %484 = vmatpush1.msra.mxu0 0.0
    %485 = vmatprep.mubr.f32.mxu0 0.0
    %v486 = vand.u32 %v46, 4294901760
    %487 = vmatmul.mubr.f32.gmra.mrb[0].mxu0 %v486
    %v488 = vpop.f32.mrb[0].mxu0
    %v489 = vadd.f32 %v398, %v488
    %v490 = vpop.f32.mrb[0].mxu0
    %491 = vmatprep.mubr.f32.mxu0 0.0
    %v492 = vand.u32 %v49, 4294901760
    %493 = vmatmul.mubr.f32.gmra.mrb[0].mxu0 %v492
    %v494 = vpop.f32.mrb[0].mxu0
    %v495 = vadd.f32 %v406, %v494
    %v496 = vpop.f32.mrb[0].mxu0
    %497 = vdwg.mxu0
    %498 = vmatprep.subr.mxu0 0.0
    %v499 = vand.u32 %v40, 4294901760
    %500 = vmatpush1.msra.mxu0 %v499
    %501 = vmatprep.subr.mxu0 0.0
    %v502 = vand.u32 %v41, 4294901760
    %503 = vmatpush1.msra.mxu0 %v502
    %504 = vmatprep.subr.mxu0 0.0
    %v505 = vand.u32 %v42, 4294901760
    %506 = vmatpush1.msra.mxu0 %v505
    %507 = vmatprep.subr.mxu0 0.0
    %v508 = vand.u32 %v43, 4294901760
    %509 = vmatpush1.msra.mxu0 %v508
    %510 = vmatprep.subr.mxu0 0.0
    %511 = vmatpush1.msra.mxu0 0.0
    %512 = vmatprep.subr.mxu0 0.0
    %513 = vmatpush1.msra.mxu0 0.0
    %514 = vmatprep.subr.mxu0 0.0
    %515 = vmatpush1.msra.mxu0 0.0
    %516 = vmatprep.subr.mxu0 0.0
    %517 = vmatpush1.msra.mxu0 0.0
    %518 = vmatprep.subr.mxu0 0.0
    %519 = vmatpush1.msra.mxu0 0.0
    %520 = vmatprep.subr.mxu0 0.0
    %521 = vmatpush1.msra.mxu0 0.0
    %522 = vmatprep.subr.mxu0 0.0
    %523 = vmatpush1.msra.mxu0 0.0
    %524 = vmatprep.subr.mxu0 0.0
    %525 = vmatpush1.msra.mxu0 0.0
    %526 = vmatprep.subr.mxu0 0.0
    %527 = vmatpush1.msra.mxu0 0.0
    %528 = vmatprep.subr.mxu0 0.0
    %529 = vmatpush1.msra.mxu0 0.0
    %530 = vmatprep.subr.mxu0 0.0
    %531 = vmatpush1.msra.mxu0 0.0
    %532 = vmatprep.subr.mxu0 0.0
    %533 = vmatpush1.msra.mxu0 0.0
    %534 = vmatprep.subr.mxu0 0.0
    %535 = vmatpush1.msra.mxu0 0.0
    %536 = vmatprep.subr.mxu0 0.0
    %537 = vmatpush1.msra.mxu0 0.0
    %538 = vmatprep.subr.mxu0 0.0
    %539 = vmatpush1.msra.mxu0 0.0
    %540 = vmatprep.subr.mxu0 0.0
    %541 = vmatpush1.msra.mxu0 0.0
    %542 = vmatprep.subr.mxu0 0.0
    %543 = vmatpush1.msra.mxu0 0.0
    %544 = vmatprep.subr.mxu0 0.0
    %545 = vmatpush1.msra.mxu0 0.0
    %546 = vmatprep.subr.mxu0 0.0
    %547 = vmatpush1.msra.mxu0 0.0
    %548 = vmatprep.subr.mxu0 0.0
    %549 = vmatpush1.msra.mxu0 0.0
    %550 = vmatprep.subr.mxu0 0.0
    %551 = vmatpush1.msra.mxu0 0.0
    %552 = vmatprep.subr.mxu0 0.0
    %553 = vmatpush1.msra.mxu0 0.0
    %554 = vmatprep.subr.mxu0 0.0
    %555 = vmatpush1.msra.mxu0 0.0
    %556 = vmatprep.subr.mxu0 0.0
    %557 = vmatpush1.msra.mxu0 0.0
    %558 = vmatprep.subr.mxu0 0.0
    %559 = vmatpush1.msra.mxu0 0.0
    %560 = vmatprep.subr.mxu0 0.0
    %561 = vmatpush1.msra.mxu0 0.0
    %562 = vmatprep.subr.mxu0 0.0
    %563 = vmatpush1.msra.mxu0 0.0
    %564 = vmatprep.subr.mxu0 0.0
    %565 = vmatpush1.msra.mxu0 0.0
    %566 = vmatprep.mubr.f32.mxu0 0.0
    %v567 = vand.u32 %v46, 4294901760
    %568 = vmatmul.mubr.f32.gmra.mrb[0].mxu0 %v567
    %v569 = vpop.f32.mrb[0].mxu0
    %v570 = vadd.f32 %v489, %v569
    %v571 = vpop.f32.mrb[0].mxu0
    %572 = vmatprep.mubr.f32.mxu0 0.0
    %v573 = vand.u32 %v49, 4294901760
    %574 = vmatmul.mubr.f32.gmra.mrb[0].mxu0 %v573
    %v575 = vpop.f32.mrb[0].mxu0
    %v576 = vadd.f32 %v495, %v575
    %v577 = vpop.f32.mrb[0].mxu0
    %578 = vdwg.mxu0
    %579 = vst [vmem:[#allocation5] sm:$0xff] %v570
    %580 = vst [vmem:[#allocation5 + $0x8] sm:$0xff] %v576
    // Predicated region
    $region14: #{tpu_custom_call.1} parent=1 // pred_check
      _
    $region15: #{tpu_custom_call.1} parent=1 // pred_check_branch
      %582 = sbr.rel (0) target = $region17
    $region16: #{tpu_custom_call.1} parent=1 // pred_region
      %s584 = ssub.s32 256, 256
      %585 = vsyncadd [#allocation4], %s584
      %s586 = sshll.u32 [#allocation5], 4
      %s587 = int_to_ptr.vmem [resolvable:$true] %s586
      %592 = dma.vmem_to_hbm [thread:$0]  %s587, 256, %s2, [#allocation4], 128, 128, 8
    $region17: #{tpu_custom_call.1} parent=1 // pred_fallthru
      _
    // Predicated region
    $region18: #{tpu_custom_call.1} parent=1 // pred_check
      _
    $region19: #{tpu_custom_call.1} parent=1 // pred_check_branch
      %594 = sbr.rel (0) target = $region21
    $region20: #{tpu_custom_call.1} parent=1 // pred_region
      %595 = dma.done [#allocation4], 256
    $region21: #{tpu_custom_call.1} parent=1 // pred_fallthru
      _
    %596 = vsyncpa [#allocation3], 1
    %597 = vsyncpa [#allocation4], 1

</llo_original>
